<compile_context>
chip_gen: v7x
topology: tpu7x:2x2x1
jax: 0.10.0
libtpu: 0.0.40
codegen_flags: <defaults>
</compile_context>

<pallas_src>
import jax
import jax.numpy as jnp
from jax.experimental import pallas as pl
from jax.experimental.pallas import tpu as pltpu


_MULTI_DMA_MIN_BYTES = 256 * 1024   # below this, one DMA is plenty
_MAX_DMA_CHUNKS = 4                 # DMAs kept in flight for large copies


def _chunk_plan(dim0: int, total_bytes: int):
    """Static (start, size) chunks along the leading axis."""
    if dim0 < 2 or total_bytes < _MULTI_DMA_MIN_BYTES:
        return [(0, dim0)]
    n = min(_MAX_DMA_CHUNKS, dim0)
    base, rem = divmod(dim0, n)
    plan, start = [], 0
    for i in range(n):
        size = base + (1 if i < rem else 0)
        plan.append((start, size))
        start += size
    return plan


def _make_dma_copy_kernel(chunks):
    """Build a kernel that copies the whole array HBM->HBM via async DMAs."""
    def kernel(x_hbm, o_hbm, sem):
        copies = []
        for i, (start, size) in enumerate(chunks):   # static Python unroll
            cp = pltpu.make_async_copy(
                x_hbm.at[pl.ds(start, size)],
                o_hbm.at[pl.ds(start, size)],
                sem.at[i],
            )
            cp.start()
            copies.append(cp)
        for cp in copies:            # wait only after all are issued
            cp.wait()
    return kernel


def _dma_copy(x: jax.Array) -> jax.Array:
    """Materialize a fresh buffer with identical contents via DMA engines."""
    n_bytes = x.size * jnp.dtype(x.dtype).itemsize
    chunks = _chunk_plan(x.shape[0], n_bytes)
    return pl.pallas_call(
        _make_dma_copy_kernel(chunks),
        out_shape=jax.ShapeDtypeStruct(x.shape, x.dtype),
        in_specs=[pl.BlockSpec(memory_space=pl.ANY)],    # raw HBM ref, no auto-DMA
        out_specs=pl.BlockSpec(memory_space=pl.ANY),     # raw HBM ref
        scratch_shapes=[pltpu.SemaphoreType.DMA((len(chunks),))],
        cost_estimate=pl.CostEstimate(
            flops=0, transcendentals=0, bytes_accessed=2 * n_bytes),
    )(x)


def identity(x: jax.Array, *, force_pallas: bool = False) -> jax.Array:
    """Pallas implementation of Identity.forward(x) -> x.

    Default (production) path: return the input — an identity op needs no
    kernel and no HBM traffic.  With force_pallas=True a pure HBM->HBM DMA
    copy kernel runs, producing a fresh buffer with identical contents.
    """
    if not force_pallas or x.size == 0:
        return x
    if x.ndim == 0:
        return _dma_copy(x.reshape(1)).reshape(())
    return _dma_copy(x)


if __name__ == "__main__":
    key = jax.random.PRNGKey(0)
    # Small NCHW input, consistent with what this module would see in the net.
    x = jax.random.normal(key, (2, 4, 16, 16), dtype=jnp.float32)

    # Default (recommended) path: Identity is free — returns the input as-is.
    y_fast = identity(x)
    assert y_fast.shape == x.shape and y_fast.dtype == x.dtype
    assert bool(jnp.array_equal(y_fast, x))

    # Forced Pallas copy: single whole-array HBM->HBM DMA (small input).
    y = jax.block_until_ready(identity(x, force_pallas=True))
    assert y.shape == x.shape
    assert y.dtype == x.dtype
    assert bool(jnp.array_equal(y, x))

    # Exercise the multi-DMA (chunked) path on a larger, tile-aligned shape.
    x2 = jax.random.normal(jax.random.PRNGKey(1), (8, 128, 128), jnp.float32)
    y2 = jax.block_until_ready(identity(x2, force_pallas=True))
    assert bool(jnp.array_equal(y2, x2))

    # Awkward (non-128-divisible) shape: single DMA, no pad/slice round trip.
    x3 = jax.random.normal(jax.random.PRNGKey(2), (3, 5, 7), jnp.float32)
    y3 = jax.block_until_ready(identity(x3, force_pallas=True))
    assert bool(jnp.array_equal(y3, x3))

    print("KERNEL_OK")
</pallas_src>

<mosaic_0001>
module attributes {stable_mosaic.version = 11 : i64} {
  func.func @kernel(%arg0: memref<2x4x16x16xf32, #tpu.memory_space<any>>, %arg1: memref<2x4x16x16xf32, #tpu.memory_space<any>>, %arg2: memref<1x!tpu.dma_semaphore, #tpu.memory_space<semaphore_mem>>) attributes {dimension_semantics = [], scalar_prefetch = 0 : i64, scratch_operands = 1 : i64, tpu.core_type = #tpu.core_type<tc>} {
    %c0_i32 = arith.constant 0 : i32
    %c0_i32_0 = arith.constant 0 : i32
    %c0_i32_1 = arith.constant 0 : i32
    %c0_i32_2 = arith.constant 0 : i32
    %c0_i32_3 = arith.constant 0 : i32
    %0 = tpu.memref_slice %arg0[%c0_i32_0, %c0_i32_1, %c0_i32_2, %c0_i32_3] : memref<2x4x16x16xf32, #tpu.memory_space<any>> -> memref<2x4x16x16xf32, #tpu.memory_space<any>>
    %c0_i32_4 = arith.constant 0 : i32
    %c0_i32_5 = arith.constant 0 : i32
    %c0_i32_6 = arith.constant 0 : i32
    %c0_i32_7 = arith.constant 0 : i32
    %1 = tpu.memref_slice %arg1[%c0_i32_4, %c0_i32_5, %c0_i32_6, %c0_i32_7] : memref<2x4x16x16xf32, #tpu.memory_space<any>> -> memref<2x4x16x16xf32, #tpu.memory_space<any>>
    %2 = tpu.memref_slice %arg2[%c0_i32] : memref<1x!tpu.dma_semaphore, #tpu.memory_space<semaphore_mem>> -> memref<1x!tpu.dma_semaphore, #tpu.memory_space<semaphore_mem>>
    %3 = tpu.memref_squeeze %2 : memref<1x!tpu.dma_semaphore, #tpu.memory_space<semaphore_mem>> -> memref<!tpu.dma_semaphore, #tpu.memory_space<semaphore_mem>>
    tpu.enqueue_dma source(%0 : memref<2x4x16x16xf32, #tpu.memory_space<any>>) target(%1 : memref<2x4x16x16xf32, #tpu.memory_space<any>>) target_semaphore(%3 : memref<!tpu.dma_semaphore, #tpu.memory_space<semaphore_mem>>)
    %c0_i32_8 = arith.constant 0 : i32
    %c0_i32_9 = arith.constant 0 : i32
    %c0_i32_10 = arith.constant 0 : i32
    %c0_i32_11 = arith.constant 0 : i32
    %c0_i32_12 = arith.constant 0 : i32
    %4 = tpu.memref_slice %arg0[%c0_i32_9, %c0_i32_10, %c0_i32_11, %c0_i32_12] : memref<2x4x16x16xf32, #tpu.memory_space<any>> -> memref<2x4x16x16xf32, #tpu.memory_space<any>>
    %c0_i32_13 = arith.constant 0 : i32
    %c0_i32_14 = arith.constant 0 : i32
    %c0_i32_15 = arith.constant 0 : i32
    %c0_i32_16 = arith.constant 0 : i32
    %5 = tpu.memref_slice %arg1[%c0_i32_13, %c0_i32_14, %c0_i32_15, %c0_i32_16] : memref<2x4x16x16xf32, #tpu.memory_space<any>> -> memref<2x4x16x16xf32, #tpu.memory_space<any>>
    %6 = tpu.memref_slice %arg2[%c0_i32_8] : memref<1x!tpu.dma_semaphore, #tpu.memory_space<semaphore_mem>> -> memref<1x!tpu.dma_semaphore, #tpu.memory_space<semaphore_mem>>
    %7 = tpu.memref_squeeze %6 : memref<1x!tpu.dma_semaphore, #tpu.memory_space<semaphore_mem>> -> memref<!tpu.dma_semaphore, #tpu.memory_space<semaphore_mem>>
    tpu.wait_dma2 semaphore(%7 : memref<!tpu.dma_semaphore, #tpu.memory_space<semaphore_mem>>) src(%4 : memref<2x4x16x16xf32, #tpu.memory_space<any>>) dst(%5 : memref<2x4x16x16xf32, #tpu.memory_space<any>>)
    return
  }
}

</mosaic_0001>

<llo_original>
// kernel: tpu_custom_call.1
$region0: #{tpu_custom_call.1}
  #allocation0 [shape = 'u32[]', space=smem, size = 0x4, offset = 0x4, fixed_abs, tag = 'smem constant byte address 0x4 - core index']
  #allocation1 [shape = 'u32[144,128]{1,0:T(1,128)}', space=vmem, size = 0x12000, scoped, tag = 'internal scratch']
  #allocation2 [shape = 's32[1]{0}', space=sflag, size = 0x4, scoped, tag = 'scratch operand']
  #allocation3 [shape = 's32[]', space=sflag, size = 0x4, offset = 0, fixed_abs, tag = 'sflag constant byte address 0x0 - dummy sync flag']
  #allocation4 [shape = 'u32[0]{0}', space=smem, size = 0, offset = 0, fixed_abs, tag = 'smem constant byte address 0x0 - null']
  %s0 = inlined_call_operand.hbm [shape: f32[2,4,16,16], index: 0, kind: input, shape index: {}]
  %s1 = inlined_call_operand.hbm [shape: f32[2,4,16,16], index: 1, kind: output, shape index: {}]
  %s2 = sld [smem:[#allocation0]]
  $region2: #{tpu_custom_call.1} parent=0
    _
  %s4 = ssub.s32 1, %s2
  %s5 = scalar_select 0, %s4, %s2
  %s7 = sshll.u32 1, 14
  %s8 = sxor.u32 4294967295, %s7
  %s11 = sshll.u32 3, 24
  %s12 = sxor.u32 4294967295, %s11
  %s13 = sand.u32 0, %s12
  %s15 = sor.u32 %s13, 0
  %18 = dma.general %s0, 2048, %s1, [#allocation2], [#allocation3], [#allocation4], %s15, 0
  %s19 = smul.u32 2, 4
  %s20 = smul.u32 %s19, 16
  %s21 = smul.u32 %s20, 1
  %s22 = sshll.u32 %s21, 4
  %23 = dma.done [#allocation2], %s22
  %24 = vsyncmov [#allocation2]
  %s25 = vpop.sfrf %24
  %p26 = scmp.eq.s32.totalorder %s25, 0
  %p27 = pneg %p26
  %29 = shalt.err (%p27)

</llo_original>
